<compile_context>
chip_gen: v5e
topology: v5e:2x2
jax: 0.10.0
libtpu: 0.0.40
codegen_flags: <defaults>
</compile_context>

<pallas_src>
import jax
import jax.numpy as jnp
from jax.experimental import pallas as pl
from jax.experimental.pallas import tpu as pltpu


def _round_up(n, m):
    return (n + m - 1) // m * m


# ----------------------------------------------------------------------------
# Kernel
# ----------------------------------------------------------------------------
def _rdb_kernel(x_ref, w1_ref, c1_ref, w2_ref, c2_ref, o_ref):
    """One batch tile: relu(x @ W1' + c1) -> relu(. @ W2' + c2) -> + x."""
    # bf16 matmuls with f32 MXU accumulation; affine / relu / residual in f32 (VPU).
    xb = x_ref[...].astype(jnp.bfloat16)
    h = jnp.dot(xb, w1_ref[...], preferred_element_type=jnp.float32) + c1_ref[...]
    h = jnp.maximum(h, 0.0)
    # dropout: identity (eval mode)
    y = jnp.dot(h.astype(jnp.bfloat16), w2_ref[...],
                preferred_element_type=jnp.float32) + c2_ref[...]
    y = jnp.maximum(y, 0.0)
    # dropout: identity (eval mode)
    # Re-read x for the residual so the f32 x tile is not live across both matmuls.
    o_ref[...] = (y + x_ref[...]).astype(o_ref.dtype)


# ----------------------------------------------------------------------------
# Parameter folding / padding (one-time, outside the per-call path)
# ----------------------------------------------------------------------------
def _fold_bn(gamma, beta, mean, var, eps=1e-5):
    scale = gamma * jax.lax.rsqrt(var + eps)
    shift = beta - mean * scale
    return scale, shift


def fold_params(params, eps=1e-5):
    """Fold eval-mode BN + Linear bias into the weights.

    Returns bf16 W1', W2' (stored (in, out)) and f32 offsets c1, c2 with
        relu(x @ W1' + c1) == relu(bn1(fc1(x)))  (and likewise for layer 2).
    """
    s1, t1 = _fold_bn(params["bn1_gamma"], params["bn1_beta"],
                      params["bn1_mean"], params["bn1_var"], eps)
    s2, t2 = _fold_bn(params["bn2_gamma"], params["bn2_beta"],
                      params["bn2_mean"], params["bn2_var"], eps)
    w1f = params["w1"] * s1[None, :]
    c1 = params["b1"] * s1 + t1
    w2f = params["w2"] * s2[None, :]
    c2 = params["b2"] * s2 + t2
    return w1f.astype(jnp.bfloat16), c1, w2f.astype(jnp.bfloat16), c2


def prepare_params(params, eps=1e-5):
    """One-time fold + 128-lane pad. Call once; reuse the result every forward."""
    w1b, c1, w2b, c2 = fold_params(params, eps)
    F, H = params["w1"].shape
    Fp = _round_up(F, 128)
    Hp = _round_up(H, 128)
    if Fp == F and Hp == H:
        w1p, w2p = w1b, w2b
        c1p = c1.reshape(1, Hp).astype(jnp.float32)
        c2p = c2.reshape(1, Fp).astype(jnp.float32)
    else:
        w1p = jnp.zeros((Fp, Hp), jnp.bfloat16).at[:F, :H].set(w1b)
        c1p = jnp.zeros((1, Hp), jnp.float32).at[0, :H].set(c1)
        w2p = jnp.zeros((Hp, Fp), jnp.bfloat16).at[:H, :F].set(w2b)
        c2p = jnp.zeros((1, Fp), jnp.float32).at[0, :F].set(c2)
    return {"w1p": w1p, "c1p": c1p, "w2p": w2p, "c2p": c2p,
            "F": F, "H": H, "Fp": Fp, "Hp": Hp}


# ----------------------------------------------------------------------------
# VMEM budgeting / tile selection (generation-aware)
# ----------------------------------------------------------------------------
def _vmem_budget_bytes():
    try:
        cap = int(pltpu.get_tpu_info().vmem_capacity_bytes)
        return (3 * cap) // 4           # ~48 MiB on v7x, ~96 MiB on v5e/v6e
    except Exception:
        return 48 << 20                 # conservative fallback, safe on v7x


def _per_row_bytes(Fp, Hp):
    # in tile (f32, x2 buffers) + out tile (f32, x2 buffers) + f32 h + bf16 x/h + f32 y
    return 8 * Fp + 8 * Fp + 4 * Hp + 2 * Fp + 2 * Hp + 4 * Fp   # = 22*Fp + 6*Hp


def _pick_tb(B, Fp, Hp, weight_bytes, budget):
    avail = budget - weight_bytes - (4 << 20)
    per_row = _per_row_bytes(Fp, Hp)
    tb = max(avail // per_row, 8)
    tb = min(tb, 512, _round_up(B, 8))
    tb = max((tb // 8) * 8, 8)
    return int(tb)


# ----------------------------------------------------------------------------
# Forward
# ----------------------------------------------------------------------------
def residual_dense_block(x, prepared):
    """x: (B, F) float32. prepared: output of prepare_params(). Eval-mode forward."""
    B, F = x.shape
    Fp, Hp = prepared["Fp"], prepared["Hp"]
    assert F == prepared["F"]
    w1p, c1p, w2p, c2p = prepared["w1p"], prepared["c1p"], prepared["w2p"], prepared["c2p"]

    budget = _vmem_budget_bytes()
    # single-buffered resident weights + biases
    weight_bytes = (w1p.size + w2p.size) * 2 + (c1p.size + c2p.size) * 4
    TB = _pick_tb(B, Fp, Hp, weight_bytes, budget)
    Bp = _round_up(B, TB)

    # Avoid the padded activation copy when shapes are already aligned.
    if Fp == F and Bp == B:
        xp = x
    else:
        xp = jnp.zeros((Bp, Fp), x.dtype).at[:B, :F].set(x)

    grid = (Bp // TB,)

    def _call(single_buffer_weights):
        resident_kw = {}
        if single_buffer_weights:
            resident_kw = dict(pipeline_mode=pl.Buffered(1))
        wb = 1 if single_buffer_weights else 2
        vmem_limit = (wb * weight_bytes
                      + TB * _per_row_bytes(Fp, Hp)
                      + (4 << 20))
        vmem_limit = max(min(int(vmem_limit), int(budget)), 16 << 20)

        return pl.pallas_call(
            _rdb_kernel,
            out_shape=jax.ShapeDtypeStruct((Bp, Fp), x.dtype),
            grid=grid,
            in_specs=[
                pl.BlockSpec((TB, Fp), lambda i: (i, 0)),                 # x streams
                pl.BlockSpec((Fp, Hp), lambda i: (0, 0), **resident_kw),  # W1' resident
                pl.BlockSpec((1, Hp), lambda i: (0, 0), **resident_kw),   # c1  resident
                pl.BlockSpec((Hp, Fp), lambda i: (0, 0), **resident_kw),  # W2' resident
                pl.BlockSpec((1, Fp), lambda i: (0, 0), **resident_kw),   # c2  resident
            ],
            out_specs=pl.BlockSpec((TB, Fp), lambda i: (i, 0)),
            compiler_params=pltpu.CompilerParams(
                dimension_semantics=("parallel",),
                vmem_limit_bytes=vmem_limit,
            ),
        )(xp, w1p, c1p, w2p, c2p)

    try:
        out = _call(True)
    except Exception:
        # Fallback: default (double) buffering if Buffered(1) is rejected.
        out = _call(False)

    if Fp == F and Bp == B:
        return out
    return out[:B, :F]


# ----------------------------------------------------------------------------
# Params / references
# ----------------------------------------------------------------------------
def init_params(key, features, hidden_features):
    """Deterministic parameter init (PyTorch-like uniform for Linear)."""
    ks = jax.random.split(key, 8)
    lim1 = 1.0 / jnp.sqrt(features)
    lim2 = 1.0 / jnp.sqrt(hidden_features)
    return {
        # stored as (in, out); PyTorch Linear weight is (out, in) -> transpose equiv.
        "w1": jax.random.uniform(ks[0], (features, hidden_features), jnp.float32, -lim1, lim1),
        "b1": jax.random.uniform(ks[1], (hidden_features,), jnp.float32, -lim1, lim1),
        "w2": jax.random.uniform(ks[2], (hidden_features, features), jnp.float32, -lim2, lim2),
        "b2": jax.random.uniform(ks[3], (features,), jnp.float32, -lim2, lim2),
        "bn1_gamma": 1.0 + 0.1 * jax.random.normal(ks[4], (hidden_features,), jnp.float32),
        "bn1_beta": 0.05 * jax.random.normal(ks[5], (hidden_features,), jnp.float32),
        "bn1_mean": jnp.zeros((hidden_features,), jnp.float32),
        "bn1_var": jnp.ones((hidden_features,), jnp.float32),
        "bn2_gamma": 1.0 + 0.1 * jax.random.normal(ks[6], (features,), jnp.float32),
        "bn2_beta": 0.05 * jax.random.normal(ks[7], (features,), jnp.float32),
        "bn2_mean": jnp.zeros((features,), jnp.float32),
        "bn2_var": jnp.ones((features,), jnp.float32),
    }


def _reference_f32(x, params):
    """Plain-JAX full-f32 eval-mode forward (loose sanity check)."""
    eps = 1e-5
    h = x @ params["w1"] + params["b1"]
    h = params["bn1_gamma"] * (h - params["bn1_mean"]) / jnp.sqrt(params["bn1_var"] + eps) \
        + params["bn1_beta"]
    h = jnp.maximum(h, 0.0)
    y = h @ params["w2"] + params["b2"]
    y = params["bn2_gamma"] * (y - params["bn2_mean"]) / jnp.sqrt(params["bn2_var"] + eps) \
        + params["bn2_beta"]
    y = jnp.maximum(y, 0.0)
    return y + x


def _reference_matched(x, params):
    """Reference using the same folded-BN, bf16-matmul / f32-accumulate recipe."""
    w1b, c1, w2b, c2 = fold_params(params)
    h = jnp.dot(x.astype(jnp.bfloat16), w1b, preferred_element_type=jnp.float32) + c1
    h = jnp.maximum(h, 0.0)
    y = jnp.dot(h.astype(jnp.bfloat16), w2b, preferred_element_type=jnp.float32) + c2
    y = jnp.maximum(y, 0.0)
    return y + x


if __name__ == "__main__":
    key = jax.random.PRNGKey(0)
    kx, kp = jax.random.split(key)

    batch, features, hidden_features = 8, 32, 64
    x = jax.random.normal(kx, (batch, features), jnp.float32)
    params = init_params(kp, features, hidden_features)

    prepared = prepare_params(params)            # one-time fold + pad (hoisted)
    out = jax.block_until_ready(residual_dense_block(x, prepared))
    assert out.shape == (batch, features)

    # Tight check vs a reference with the identical numeric recipe.
    ref_m = _reference_matched(x, params)
    assert jnp.allclose(out, ref_m, atol=1e-4, rtol=1e-4), \
        float(jnp.max(jnp.abs(out - ref_m)))

    # Loose check vs the full-f32 eval-mode forward (bf16 matmul tolerance).
    ref_f = _reference_f32(x, params)
    assert jnp.allclose(out, ref_f, atol=5e-2, rtol=5e-2), \
        float(jnp.max(jnp.abs(out - ref_f)))

    print("KERNEL_OK")
</pallas_src>

<mosaic_0001>
module attributes {stable_mosaic.version = 11 : i64} {
  func.func @_rdb_kernel(%arg0: i32, %arg1: memref<8x128xf32, #tpu.memory_space<vmem>>, %arg2: memref<128x128xbf16, #tpu.memory_space<vmem>>, %arg3: memref<1x128xf32, #tpu.memory_space<vmem>>, %arg4: memref<128x128xbf16, #tpu.memory_space<vmem>>, %arg5: memref<1x128xf32, #tpu.memory_space<vmem>>, %arg6: memref<8x128xf32, #tpu.memory_space<vmem>>) attributes {dimension_semantics = [#tpu.dimension_semantics<parallel>], iteration_bounds = array<i64: 1>, scalar_prefetch = 0 : i64, scratch_operands = 0 : i64, tpu.core_type = #tpu.core_type<tc>, window_params = [{transform_indices = @transform_0, window_bounds = array<i64: 8, 128>}, {pipeline_mode = #tpu.pipeline_mode<synchronous>, transform_indices = @transform_1, window_bounds = array<i64: 128, 128>}, {pipeline_mode = #tpu.pipeline_mode<synchronous>, transform_indices = @transform_2, window_bounds = array<i64: 1, 128>}, {pipeline_mode = #tpu.pipeline_mode<synchronous>, transform_indices = @transform_3, window_bounds = array<i64: 128, 128>}, {pipeline_mode = #tpu.pipeline_mode<synchronous>, transform_indices = @transform_4, window_bounds = array<i64: 1, 128>}, {transform_indices = @transform_5, window_bounds = array<i64: 8, 128>}]} {
    %c0 = arith.constant 0 : index
    %c0_0 = arith.constant 0 : index
    %0 = vector.load %arg1[%c0, %c0_0] : memref<8x128xf32, #tpu.memory_space<vmem>>, vector<8x128xf32>
    %1 = arith.truncf %0 : vector<8x128xf32> to vector<8x128xbf16>
    %c0_1 = arith.constant 0 : index
    %c0_2 = arith.constant 0 : index
    %2 = vector.load %arg2[%c0_1, %c0_2] : memref<128x128xbf16, #tpu.memory_space<vmem>>, vector<128x128xbf16>
    %cst = arith.constant dense<0.000000e+00> : vector<8x128xf32>
    %3 = tpu.matmul %1, %2, %cst {dimension_numbers = #tpu.dot_dimension_numbers<[1], [0], [0], [1], [0, 0, 1, 1], [], []>} : vector<8x128xbf16>, vector<128x128xbf16>, vector<8x128xf32> -> vector<8x128xf32>
    %c0_3 = arith.constant 0 : index
    %c0_4 = arith.constant 0 : index
    %4 = vector.load %arg3[%c0_3, %c0_4] : memref<1x128xf32, #tpu.memory_space<vmem>>, vector<1x128xf32>
    %5 = vector.broadcast %4 : vector<1x128xf32> to vector<8x128xf32>
    %6 = arith.addf %3, %5 : vector<8x128xf32>
    %cst_5 = arith.constant 0.000000e+00 : f32
    %7 = vector.broadcast %cst_5 : f32 to vector<8x128xf32>
    %8 = arith.maximumf %6, %7 : vector<8x128xf32>
    %9 = arith.truncf %8 : vector<8x128xf32> to vector<8x128xbf16>
    %c0_6 = arith.constant 0 : index
    %c0_7 = arith.constant 0 : index
    %10 = vector.load %arg4[%c0_6, %c0_7] : memref<128x128xbf16, #tpu.memory_space<vmem>>, vector<128x128xbf16>
    %cst_8 = arith.constant dense<0.000000e+00> : vector<8x128xf32>
    %11 = tpu.matmul %9, %10, %cst_8 {dimension_numbers = #tpu.dot_dimension_numbers<[1], [0], [0], [1], [0, 0, 1, 1], [], []>} : vector<8x128xbf16>, vector<128x128xbf16>, vector<8x128xf32> -> vector<8x128xf32>
    %c0_9 = arith.constant 0 : index
    %c0_10 = arith.constant 0 : index
    %12 = vector.load %arg5[%c0_9, %c0_10] : memref<1x128xf32, #tpu.memory_space<vmem>>, vector<1x128xf32>
    %13 = vector.broadcast %12 : vector<1x128xf32> to vector<8x128xf32>
    %14 = arith.addf %11, %13 : vector<8x128xf32>
    %cst_11 = arith.constant 0.000000e+00 : f32
    %15 = vector.broadcast %cst_11 : f32 to vector<8x128xf32>
    %16 = arith.maximumf %14, %15 : vector<8x128xf32>
    %c0_12 = arith.constant 0 : index
    %c0_13 = arith.constant 0 : index
    %17 = vector.load %arg1[%c0_12, %c0_13] : memref<8x128xf32, #tpu.memory_space<vmem>>, vector<8x128xf32>
    %18 = arith.addf %16, %17 : vector<8x128xf32>
    %c0_14 = arith.constant 0 : index
    %c0_15 = arith.constant 0 : index
    %19 = vector.load %arg6[%c0_14, %c0_15] : memref<8x128xf32, #tpu.memory_space<vmem>>, vector<8x128xf32>
    tpu.vector_store %arg6[%c0_14, %c0_15], %18 {strides = array<i32>} : memref<8x128xf32, #tpu.memory_space<vmem>>, vector<8x128xf32>,
    return
  }
  func.func @transform_0(%arg0: i32) -> (i32, i32) {
    %c0_i32 = arith.constant 0 : i32
    %c0_i32_0 = arith.constant 0 : i32
    return %arg0, %c0_i32 : i32, i32
  }
  func.func @transform_1(%arg0: i32) -> (i32, i32) {
    %c0_i32 = arith.constant 0 : i32
    %c0_i32_0 = arith.constant 0 : i32
    %c0_i32_1 = arith.constant 0 : i32
    return %c0_i32, %c0_i32_0 : i32, i32
  }
  func.func @transform_2(%arg0: i32) -> (i32, i32) {
    %c0_i32 = arith.constant 0 : i32
    %c0_i32_0 = arith.constant 0 : i32
    %c0_i32_1 = arith.constant 0 : i32
    return %c0_i32, %c0_i32_0 : i32, i32
  }
  func.func @transform_3(%arg0: i32) -> (i32, i32) {
    %c0_i32 = arith.constant 0 : i32
    %c0_i32_0 = arith.constant 0 : i32
    %c0_i32_1 = arith.constant 0 : i32
    return %c0_i32, %c0_i32_0 : i32, i32
  }
  func.func @transform_4(%arg0: i32) -> (i32, i32) {
    %c0_i32 = arith.constant 0 : i32
    %c0_i32_0 = arith.constant 0 : i32
    %c0_i32_1 = arith.constant 0 : i32
    return %c0_i32, %c0_i32_0 : i32, i32
  }
  func.func @transform_5(%arg0: i32) -> (i32, i32) {
    %c0_i32 = arith.constant 0 : i32
    %c0_i32_0 = arith.constant 0 : i32
    return %arg0, %c0_i32 : i32, i32
  }
}

module attributes {stable_mosaic.version = 11 : i64} {
  func.func @_rdb_kernel(%arg0: i32, %arg1: memref<8x128xf32, #tpu.memory_space<vmem>>, %arg2: memref<128x128xbf16, #tpu.memory_space<vmem>>, %arg3: memref<1x128xf32, #tpu.memory_space<vmem>>, %arg4: memref<128x128xbf16, #tpu.memory_space<vmem>>, %arg5: memref<1x128xf32, #tpu.memory_space<vmem>>, %arg6: memref<8x128xf32, #tpu.memory_space<vmem>>) attributes {dimension_semantics = [#tpu.dimension_semantics<parallel>], iteration_bounds = array<i64: 1>, scalar_prefetch = 0 : i64, scratch_operands = 0 : i64, tpu.core_type = #tpu.core_type<tc>, window_params = [{transform_indices = @transform_0, window_bounds = array<i64: 8, 128>}, {pipeline_mode = #tpu.pipeline_mode<synchronous>, transform_indices = @transform_1, window_bounds = array<i64: 128, 128>}, {pipeline_mode = #tpu.pipeline_mode<synchronous>, transform_indices = @transform_2, window_bounds = array<i64: 1, 128>}, {pipeline_mode = #tpu.pipeline_mode<synchronous>, transform_indices = @transform_3, window_bounds = array<i64: 128, 128>}, {pipeline_mode = #tpu.pipeline_mode<synchronous>, transform_indices = @transform_4, window_bounds = array<i64: 1, 128>}, {transform_indices = @transform_5, window_bounds = array<i64: 8, 128>}]} {
    %c0 = arith.constant 0 : index
    %c0_0 = arith.constant 0 : index
    %0 = vector.load %arg1[%c0, %c0_0] : memref<8x128xf32, #tpu.memory_space<vmem>>, vector<8x128xf32>
    %1 = arith.truncf %0 : vector<8x128xf32> to vector<8x128xbf16>
    %c0_1 = arith.constant 0 : index
    %c0_2 = arith.constant 0 : index
    %2 = vector.load %arg2[%c0_1, %c0_2] : memref<128x128xbf16, #tpu.memory_space<vmem>>, vector<128x128xbf16>
    %cst = arith.constant dense<0.000000e+00> : vector<8x128xf32>
    %3 = tpu.matmul %1, %2, %cst {dimension_numbers = #tpu.dot_dimension_numbers<[1], [0], [0], [1], [0, 0, 1, 1], [], []>} : vector<8x128xbf16>, vector<128x128xbf16>, vector<8x128xf32> -> vector<8x128xf32>
    %c0_3 = arith.constant 0 : index
    %c0_4 = arith.constant 0 : index
    %4 = vector.load %arg3[%c0_3, %c0_4] : memref<1x128xf32, #tpu.memory_space<vmem>>, vector<1x128xf32>
    %5 = vector.broadcast %4 : vector<1x128xf32> to vector<8x128xf32>
    %6 = arith.addf %3, %5 : vector<8x128xf32>
    %cst_5 = arith.constant 0.000000e+00 : f32
    %7 = vector.broadcast %cst_5 : f32 to vector<8x128xf32>
    %8 = arith.maximumf %6, %7 : vector<8x128xf32>
    %9 = arith.truncf %8 : vector<8x128xf32> to vector<8x128xbf16>
    %c0_6 = arith.constant 0 : index
    %c0_7 = arith.constant 0 : index
    %10 = vector.load %arg4[%c0_6, %c0_7] : memref<128x128xbf16, #tpu.memory_space<vmem>>, vector<128x128xbf16>
    %cst_8 = arith.constant dense<0.000000e+00> : vector<8x128xf32>
    %11 = tpu.matmul %9, %10, %cst_8 {dimension_numbers = #tpu.dot_dimension_numbers<[1], [0], [0], [1], [0, 0, 1, 1], [], []>} : vector<8x128xbf16>, vector<128x128xbf16>, vector<8x128xf32> -> vector<8x128xf32>
    %c0_9 = arith.constant 0 : index
    %c0_10 = arith.constant 0 : index
    %12 = vector.load %arg5[%c0_9, %c0_10] : memref<1x128xf32, #tpu.memory_space<vmem>>, vector<1x128xf32>
    %13 = vector.broadcast %12 : vector<1x128xf32> to vector<8x128xf32>
    %14 = arith.addf %11, %13 : vector<8x128xf32>
    %cst_11 = arith.constant 0.000000e+00 : f32
    %15 = vector.broadcast %cst_11 : f32 to vector<8x128xf32>
    %16 = arith.maximumf %14, %15 : vector<8x128xf32>
    %c0_12 = arith.constant 0 : index
    %c0_13 = arith.constant 0 : index
    %17 = vector.load %arg1[%c0_12, %c0_13] : memref<8x128xf32, #tpu.memory_space<vmem>>, vector<8x128xf32>
    %18 = arith.addf %16, %17 : vector<8x128xf32>
    %c0_14 = arith.constant 0 : index
    %c0_15 = arith.constant 0 : index
    %19 = vector.load %arg6[%c0_14, %c0_15] : memref<8x128xf32, #tpu.memory_space<vmem>>, vector<8x128xf32>
    tpu.vector_store %arg6[%c0_14, %c0_15], %18 {strides = array<i32>} : memref<8x128xf32, #tpu.memory_space<vmem>>, vector<8x128xf32>,
    return
  }
  func.func @transform_0(%arg0: i32) -> (i32, i32) {
    %c0_i32 = arith.constant 0 : i32
    %c0_i32_0 = arith.constant 0 : i32
    return %arg0, %c0_i32 : i32, i32
  }
  func.func @transform_1(%arg0: i32) -> (i32, i32) {
    %c0_i32 = arith.constant 0 : i32
    %c0_i32_0 = arith.constant 0 : i32
    %c0_i32_1 = arith.constant 0 : i32
    return %c0_i32, %c0_i32_0 : i32, i32
  }
  func.func @transform_2(%arg0: i32) -> (i32, i32) {
    %c0_i32 = arith.constant 0 : i32
    %c0_i32_0 = arith.constant 0 : i32
    %c0_i32_1 = arith.constant 0 : i32
    return %c0_i32, %c0_i32_0 : i32, i32
  }
  func.func @transform_3(%arg0: i32) -> (i32, i32) {
    %c0_i32 = arith.constant 0 : i32
    %c0_i32_0 = arith.constant 0 : i32
    %c0_i32_1 = arith.constant 0 : i32
    return %c0_i32, %c0_i32_0 : i32, i32
  }
  func.func @transform_4(%arg0: i32) -> (i32, i32) {
    %c0_i32 = arith.constant 0 : i32
    %c0_i32_0 = arith.constant 0 : i32
    %c0_i32_1 = arith.constant 0 : i32
    return %c0_i32, %c0_i32_0 : i32, i32
  }
  func.func @transform_5(%arg0: i32) -> (i32, i32) {
    %c0_i32 = arith.constant 0 : i32
    %c0_i32_0 = arith.constant 0 : i32
    return %arg0, %c0_i32 : i32, i32
  }
}

</mosaic_0001>

<llo_original>
// kernel: tpu_custom_call.1
$region0: #{tpu_custom_call.1}
  #allocation0 [shape = 'u32[]', space=smem, size = 0x4, offset = 0x4, fixed_abs, tag = 'smem constant byte address 0x4 - core index']
  #allocation1 [shape = 'u32[72,128]{1,0:T(1,128)}', space=vmem, size = 0x9000, scoped, tag = 'internal scratch']
  %s0 = inlined_call_operand.hbm [shape: f32[8,128], index: 0, kind: input, shape index: {}]
  %s1 = inlined_call_operand.hbm [shape: bf16[128,128], index: 1, kind: input, shape index: {}]
  %s2 = inlined_call_operand.vmem [shape: f32[1,128], index: 2, kind: input, shape index: {}]
  %s3 = inlined_call_operand.hbm [shape: bf16[128,128], index: 3, kind: input, shape index: {}]
  %s4 = inlined_call_operand.vmem [shape: f32[1,128], index: 4, kind: input, shape index: {}]
  %s5 = inlined_call_operand.hbm [shape: f32[8,128], index: 5, kind: output, shape index: {}]
  %s6 = sld [smem:[#allocation0]]
  $region42: #{tpu_custom_call.1} parent=0
    _
  %s8 = ssub.s32 1, %s6
  %s9 = scalar_select 0, %s8, %s6
  $region1: #{tpu_custom_call.1} parent=0
    #allocation2 [shape = 'u8[4096]{0}', space=vmem, size = 0x1000, scoped, tag = 'input window, operand 0, single buffered']
    #allocation3 [shape = 's32[1]{0}', space=sflag, size = 0x4, scoped, tag = 'scoped memory for tpu_custom_call.1']
    #allocation4 [shape = 's32[1]{0}', space=sflag, size = 0x4, scoped, tag = 'scoped memory for tpu_custom_call.1']
    #allocation5 [shape = 'u8[32768]{0}', space=vmem, size = 0x8000, scoped, tag = 'input window, operand 1, single buffered']
    #allocation6 [shape = 's32[1]{0}', space=sflag, size = 0x4, scoped, tag = 'scoped memory for tpu_custom_call.1']
    #allocation7 [shape = 'u8[32768]{0}', space=vmem, size = 0x8000, scoped, tag = 'input window, operand 3, single buffered']
    #allocation8 [shape = 'u8[4096]{0}', space=vmem, size = 0x1000, scoped, tag = 'output window, operand 0, single buffered']
    %10 = vsyncpa [#allocation3], 0
    %11 = vsyncpa [#allocation6], 0
    %12 = vsyncpa [#allocation4], 0
    // Predicated region
    $region2: #{tpu_custom_call.1} parent=1 // pred_check
      _
    $region3: #{tpu_custom_call.1} parent=1 // pred_check_branch
      %14 = sbr.rel (0) target = $region5
    $region4: #{tpu_custom_call.1} parent=1 // pred_region
      %16 = vsyncadd [#allocation3], 0
      %s18 = sshll.u32 %s0, 4
      %s19 = int_to_ptr.hbm [resolvable:$true] %s18
      %s20 = sshll.u32 [#allocation2], 4
      %s21 = int_to_ptr.vmem [resolvable:$true] %s20
      %23 = dma.hbm_to_vmem [thread:$0]  %s19, 128, %s21, [#allocation3]
    $region5: #{tpu_custom_call.1} parent=1 // pred_fallthru
      _
    // Predicated region
    $region6: #{tpu_custom_call.1} parent=1 // pred_check
      _
    $region7: #{tpu_custom_call.1} parent=1 // pred_check_branch
      %25 = sbr.rel (0) target = $region9
    $region8: #{tpu_custom_call.1} parent=1 // pred_region
      %27 = vsyncadd [#allocation6], 0
      %s28 = sshll.u32 %s1, 4
      %s29 = int_to_ptr.hbm [resolvable:$true] %s28
      %s30 = sshll.u32 [#allocation5], 4
      %s31 = int_to_ptr.vmem [resolvable:$true] %s30
      %36 = dma.hbm_to_vmem [thread:$0]  %s29, 1024, %s31, [#allocation6], 64, 64, 4
    $region9: #{tpu_custom_call.1} parent=1 // pred_fallthru
      _
    // Predicated region
    $region10: #{tpu_custom_call.1} parent=1 // pred_check
      _
    $region11: #{tpu_custom_call.1} parent=1 // pred_check_branch
      %38 = sbr.rel (0) target = $region13
    $region12: #{tpu_custom_call.1} parent=1 // pred_region
      _
    $region13: #{tpu_custom_call.1} parent=1 // pred_fallthru
      _
    // Predicated region
    $region14: #{tpu_custom_call.1} parent=1 // pred_check
      _
    $region15: #{tpu_custom_call.1} parent=1 // pred_check_branch
      %40 = sbr.rel (0) target = $region17
    $region16: #{tpu_custom_call.1} parent=1 // pred_region
      %42 = vsyncadd [#allocation6], 0
      %s43 = sshll.u32 %s3, 4
      %s44 = int_to_ptr.hbm [resolvable:$true] %s43
      %s45 = sshll.u32 [#allocation7], 4
      %s46 = int_to_ptr.vmem [resolvable:$true] %s45
      %51 = dma.hbm_to_vmem [thread:$0]  %s44, 1024, %s46, [#allocation6], 64, 64, 4
    $region17: #{tpu_custom_call.1} parent=1 // pred_fallthru
      _
    // Predicated region
    $region18: #{tpu_custom_call.1} parent=1 // pred_check
      _
    $region19: #{tpu_custom_call.1} parent=1 // pred_check_branch
      %53 = sbr.rel (0) target = $region21
    $region20: #{tpu_custom_call.1} parent=1 // pred_region
      _
    $region21: #{tpu_custom_call.1} parent=1 // pred_fallthru
      _
    // Predicated region
    $region22: #{tpu_custom_call.1} parent=1 // pred_check
      _
    $region23: #{tpu_custom_call.1} parent=1 // pred_check_branch
      %55 = sbr.rel (0) target = $region25
    $region24: #{tpu_custom_call.1} parent=1 // pred_region
      %57 = dma.done [#allocation3], 128
    $region25: #{tpu_custom_call.1} parent=1 // pred_fallthru
      _
    // Predicated region
    $region26: #{tpu_custom_call.1} parent=1 // pred_check
      _
    $region27: #{tpu_custom_call.1} parent=1 // pred_check_branch
      %59 = sbr.rel (0) target = $region29
    $region28: #{tpu_custom_call.1} parent=1 // pred_region
      %61 = dma.done [#allocation6], 1024
    $region29: #{tpu_custom_call.1} parent=1 // pred_fallthru
      _
    // Predicated region
    $region30: #{tpu_custom_call.1} parent=1 // pred_check
      _
    $region31: #{tpu_custom_call.1} parent=1 // pred_check_branch
      %63 = sbr.rel (0) target = $region33
    $region32: #{tpu_custom_call.1} parent=1 // pred_region
      %65 = dma.done [#allocation6], 1024
    $region33: #{tpu_custom_call.1} parent=1 // pred_fallthru
      _
    %v66 = vld [vmem:[#allocation2] sm:$0xff]
    %v67 = vpack.c.bf16 %v66, %v66
    %v68 = vld [vmem:[#allocation5] sm:$0xf]
    %v69 = vld [vmem:[#allocation5 + $0x4] sm:$0xf]
    %v70 = vld [vmem:[#allocation5 + $0x8] sm:$0xf]
    %v71 = vld [vmem:[#allocation5 + $0xc] sm:$0xf]
    %v72 = vld [vmem:[#allocation5 + $0x10] sm:$0xf]
    %v73 = vld [vmem:[#allocation5 + $0x14] sm:$0xf]
    %v74 = vld [vmem:[#allocation5 + $0x18] sm:$0xf]
    %v75 = vld [vmem:[#allocation5 + $0x1c] sm:$0xf]
    %v76 = vld [vmem:[#allocation5 + $0x20] sm:$0xf]
    %v77 = vld [vmem:[#allocation5 + $0x24] sm:$0xf]
    %v78 = vld [vmem:[#allocation5 + $0x28] sm:$0xf]
    %v79 = vld [vmem:[#allocation5 + $0x2c] sm:$0xf]
    %v80 = vld [vmem:[#allocation5 + $0x30] sm:$0xf]
    %v81 = vld [vmem:[#allocation5 + $0x34] sm:$0xf]
    %v82 = vld [vmem:[#allocation5 + $0x38] sm:$0xf]
    %v83 = vld [vmem:[#allocation5 + $0x3c] sm:$0xf]
    %v84 = vld [vmem:[%s2] sm:$0x1]
    %v86 = vperm.slane %v84, 0
    %v104 = vunpack.c.l.b16 %v68
    %v105 = vunpack.c.l.b16 %v69
    %v106 = vunpack.c.l.b16 %v70
    %v107 = vunpack.c.l.b16 %v71
    %v108 = vunpack.c.l.b16 %v72
    %v109 = vunpack.c.l.b16 %v73
    %v110 = vunpack.c.l.b16 %v74
    %v111 = vunpack.c.l.b16 %v75
    %v112 = vunpack.c.l.b16 %v76
    %v113 = vunpack.c.l.b16 %v77
    %v114 = vunpack.c.l.b16 %v78
    %v115 = vunpack.c.l.b16 %v79
    %v116 = vunpack.c.l.b16 %v80
    %v117 = vunpack.c.l.b16 %v81
    %v118 = vunpack.c.l.b16 %v82
    %v119 = vunpack.c.l.b16 %v83
    %v120 = vpack.c.b16 %v105, %v104
    %v121 = vpack.c.b16 %v107, %v106
    %v122 = vpack.c.b16 %v109, %v108
    %v123 = vpack.c.b16 %v111, %v110
    %v124 = vpack.c.b16 %v113, %v112
    %v125 = vpack.c.b16 %v115, %v114
    %v126 = vpack.c.b16 %v117, %v116
    %v127 = vpack.c.b16 %v119, %v118
    %136 = vmatpush.bf16.msra.mxu0 %v127
    %137 = vmatpush.bf16.msra.mxu0 %v126
    %138 = vmatpush.bf16.msra.mxu0 %v125
    %139 = vmatpush.bf16.msra.mxu0 %v124
    %140 = vmatpush.bf16.msra.mxu0 %v123
    %141 = vmatpush.bf16.msra.mxu0 %v122
    %142 = vmatpush.bf16.msra.mxu0 %v121
    %143 = vmatpush.bf16.msra.mxu0 %v120
    %144 = vmatmul.bf16.gmra.mxu0 %v67
    %v145 = vpop.f32.mrf.mxu0
    %v146 = vadd.f32 %v86, %v145
    %v147 = vpop.f32.mrf.mxu0
    %148 = vdwg.mxu0
    %v149 = vmax.f32 %v146, 0.0
    %v150 = vpack.c.bf16 %v149, %v149
    %v151 = vld [vmem:[#allocation7] sm:$0xf]
    %v152 = vld [vmem:[#allocation7 + $0x4] sm:$0xf]
    %v153 = vld [vmem:[#allocation7 + $0x8] sm:$0xf]
    %v154 = vld [vmem:[#allocation7 + $0xc] sm:$0xf]
    %v155 = vld [vmem:[#allocation7 + $0x10] sm:$0xf]
    %v156 = vld [vmem:[#allocation7 + $0x14] sm:$0xf]
    %v157 = vld [vmem:[#allocation7 + $0x18] sm:$0xf]
    %v158 = vld [vmem:[#allocation7 + $0x1c] sm:$0xf]
    %v159 = vld [vmem:[#allocation7 + $0x20] sm:$0xf]
    %v160 = vld [vmem:[#allocation7 + $0x24] sm:$0xf]
    %v161 = vld [vmem:[#allocation7 + $0x28] sm:$0xf]
    %v162 = vld [vmem:[#allocation7 + $0x2c] sm:$0xf]
    %v163 = vld [vmem:[#allocation7 + $0x30] sm:$0xf]
    %v164 = vld [vmem:[#allocation7 + $0x34] sm:$0xf]
    %v165 = vld [vmem:[#allocation7 + $0x38] sm:$0xf]
    %v166 = vld [vmem:[#allocation7 + $0x3c] sm:$0xf]
    %v167 = vld [vmem:[%s4] sm:$0x1]
    %v169 = vperm.slane %v167, 0
    %v187 = vunpack.c.l.b16 %v151
    %v188 = vunpack.c.l.b16 %v152
    %v189 = vunpack.c.l.b16 %v153
    %v190 = vunpack.c.l.b16 %v154
    %v191 = vunpack.c.l.b16 %v155
    %v192 = vunpack.c.l.b16 %v156
    %v193 = vunpack.c.l.b16 %v157
    %v194 = vunpack.c.l.b16 %v158
    %v195 = vunpack.c.l.b16 %v159
    %v196 = vunpack.c.l.b16 %v160
    %v197 = vunpack.c.l.b16 %v161
    %v198 = vunpack.c.l.b16 %v162
    %v199 = vunpack.c.l.b16 %v163
    %v200 = vunpack.c.l.b16 %v164
    %v201 = vunpack.c.l.b16 %v165
    %v202 = vunpack.c.l.b16 %v166
    %v203 = vpack.c.b16 %v188, %v187
    %v204 = vpack.c.b16 %v190, %v189
    %v205 = vpack.c.b16 %v192, %v191
    %v206 = vpack.c.b16 %v194, %v193
    %v207 = vpack.c.b16 %v196, %v195
    %v208 = vpack.c.b16 %v198, %v197
    %v209 = vpack.c.b16 %v200, %v199
    %v210 = vpack.c.b16 %v202, %v201
    %219 = vmatpush.bf16.msra.mxu0 %v210
    %220 = vmatpush.bf16.msra.mxu0 %v209
    %221 = vmatpush.bf16.msra.mxu0 %v208
    %222 = vmatpush.bf16.msra.mxu0 %v207
    %223 = vmatpush.bf16.msra.mxu0 %v206
    %224 = vmatpush.bf16.msra.mxu0 %v205
    %225 = vmatpush.bf16.msra.mxu0 %v204
    %226 = vmatpush.bf16.msra.mxu0 %v203
    %227 = vmatmul.bf16.gmra.mxu0 %v150
    %v228 = vpop.f32.mrf.mxu0
    %v229 = vadd.f32 %v169, %v228
    %v230 = vpop.f32.mrf.mxu0
    %231 = vdwg.mxu0
    %v232 = vmax.f32 %v229, 0.0
    %v233 = vadd.f32 %v232, %v66
    %234 = vst [vmem:[#allocation8] sm:$0xff] %v233
    // Predicated region
    $region34: #{tpu_custom_call.1} parent=1 // pred_check
      _
    $region35: #{tpu_custom_call.1} parent=1 // pred_check_branch
      %236 = sbr.rel (0) target = $region37
    $region36: #{tpu_custom_call.1} parent=1 // pred_region
      %238 = vsyncadd [#allocation4], 0
      %s240 = sshll.u32 [#allocation8], 4
      %s241 = int_to_ptr.vmem [resolvable:$true] %s240
      %s242 = sshll.u32 %s5, 4
      %s243 = int_to_ptr.hbm [resolvable:$true] %s242
      %245 = dma.vmem_to_hbm [thread:$0]  %s241, 128, %s243, [#allocation4]
    $region37: #{tpu_custom_call.1} parent=1 // pred_fallthru
      _
    // Predicated region
    $region38: #{tpu_custom_call.1} parent=1 // pred_check
      _
    $region39: #{tpu_custom_call.1} parent=1 // pred_check_branch
      %247 = sbr.rel (0) target = $region41
    $region40: #{tpu_custom_call.1} parent=1 // pred_region
      %249 = dma.done [#allocation4], 128
    $region41: #{tpu_custom_call.1} parent=1 // pred_fallthru
      _
    %250 = vsyncpa [#allocation3], 1
    %251 = vsyncpa [#allocation6], 1
    %252 = vsyncpa [#allocation4], 1

// kernel: tpu_custom_call.1
$region0: #{tpu_custom_call.1}
  #allocation0 [shape = 'u32[]', space=smem, size = 0x4, offset = 0x4, fixed_abs, tag = 'smem constant byte address 0x4 - core index']
  #allocation1 [shape = 'u32[72,128]{1,0:T(1,128)}', space=vmem, size = 0x9000, scoped, tag = 'internal scratch']
  %s0 = inlined_call_operand.hbm [shape: f32[8,128], index: 0, kind: input, shape index: {}]
  %s1 = inlined_call_operand.hbm [shape: bf16[128,128], index: 1, kind: input, shape index: {}]
  %s2 = inlined_call_operand.vmem [shape: f32[1,128], index: 2, kind: input, shape index: {}]
  %s3 = inlined_call_operand.hbm [shape: bf16[128,128], index: 3, kind: input, shape index: {}]
  %s4 = inlined_call_operand.vmem [shape: f32[1,128], index: 4, kind: input, shape index: {}]
  %s5 = inlined_call_operand.hbm [shape: f32[8,128], index: 5, kind: output, shape index: {}]
  %s6 = sld [smem:[#allocation0]]
  $region42: #{tpu_custom_call.1} parent=0
    _
  %s8 = ssub.s32 1, %s6
  %s9 = scalar_select 0, %s8, %s6
  $region1: #{tpu_custom_call.1} parent=0
    #allocation2 [shape = 'u8[4096]{0}', space=vmem, size = 0x1000, scoped, tag = 'input window, operand 0, single buffered']
    #allocation3 [shape = 's32[1]{0}', space=sflag, size = 0x4, scoped, tag = 'scoped memory for tpu_custom_call.1']
    #allocation4 [shape = 's32[1]{0}', space=sflag, size = 0x4, scoped, tag = 'scoped memory for tpu_custom_call.1']
    #allocation5 [shape = 'u8[32768]{0}', space=vmem, size = 0x8000, scoped, tag = 'input window, operand 1, single buffered']
    #allocation6 [shape = 's32[1]{0}', space=sflag, size = 0x4, scoped, tag = 'scoped memory for tpu_custom_call.1']
    #allocation7 [shape = 'u8[32768]{0}', space=vmem, size = 0x8000, scoped, tag = 'input window, operand 3, single buffered']
    #allocation8 [shape = 'u8[4096]{0}', space=vmem, size = 0x1000, scoped, tag = 'output window, operand 0, single buffered']
    %10 = vsyncpa [#allocation3], 0
    %11 = vsyncpa [#allocation6], 0
    %12 = vsyncpa [#allocation4], 0
    // Predicated region
    $region2: #{tpu_custom_call.1} parent=1 // pred_check
      _
    $region3: #{tpu_custom_call.1} parent=1 // pred_check_branch
      %14 = sbr.rel (0) target = $region5
    $region4: #{tpu_custom_call.1} parent=1 // pred_region
      %16 = vsyncadd [#allocation3], 0
      %s18 = sshll.u32 %s0, 4
      %s19 = int_to_ptr.hbm [resolvable:$true] %s18
      %s20 = sshll.u32 [#allocation2], 4
      %s21 = int_to_ptr.vmem [resolvable:$true] %s20
      %23 = dma.hbm_to_vmem [thread:$0]  %s19, 128, %s21, [#allocation3]
    $region5: #{tpu_custom_call.1} parent=1 // pred_fallthru
      _
    // Predicated region
    $region6: #{tpu_custom_call.1} parent=1 // pred_check
      _
    $region7: #{tpu_custom_call.1} parent=1 // pred_check_branch
      %25 = sbr.rel (0) target = $region9
    $region8: #{tpu_custom_call.1} parent=1 // pred_region
      %27 = vsyncadd [#allocation6], 0
      %s28 = sshll.u32 %s1, 4
      %s29 = int_to_ptr.hbm [resolvable:$true] %s28
      %s30 = sshll.u32 [#allocation5], 4
      %s31 = int_to_ptr.vmem [resolvable:$true] %s30
      %36 = dma.hbm_to_vmem [thread:$0]  %s29, 1024, %s31, [#allocation6], 64, 64, 4
    $region9: #{tpu_custom_call.1} parent=1 // pred_fallthru
      _
    // Predicated region
    $region10: #{tpu_custom_call.1} parent=1 // pred_check
      _
    $region11: #{tpu_custom_call.1} parent=1 // pred_check_branch
      %38 = sbr.rel (0) target = $region13
    $region12: #{tpu_custom_call.1} parent=1 // pred_region
      _
    $region13: #{tpu_custom_call.1} parent=1 // pred_fallthru
      _
    // Predicated region
    $region14: #{tpu_custom_call.1} parent=1 // pred_check
      _
    $region15: #{tpu_custom_call.1} parent=1 // pred_check_branch
      %40 = sbr.rel (0) target = $region17
    $region16: #{tpu_custom_call.1} parent=1 // pred_region
      %42 = vsyncadd [#allocation6], 0
      %s43 = sshll.u32 %s3, 4
      %s44 = int_to_ptr.hbm [resolvable:$true] %s43
      %s45 = sshll.u32 [#allocation7], 4
      %s46 = int_to_ptr.vmem [resolvable:$true] %s45
      %51 = dma.hbm_to_vmem [thread:$0]  %s44, 1024, %s46, [#allocation6], 64, 64, 4
    $region17: #{tpu_custom_call.1} parent=1 // pred_fallthru
      _
    // Predicated region
    $region18: #{tpu_custom_call.1} parent=1 // pred_check
      _
    $region19: #{tpu_custom_call.1} parent=1 // pred_check_branch
      %53 = sbr.rel (0) target = $region21
    $region20: #{tpu_custom_call.1} parent=1 // pred_region
      _
    $region21: #{tpu_custom_call.1} parent=1 // pred_fallthru
      _
    // Predicated region
    $region22: #{tpu_custom_call.1} parent=1 // pred_check
      _
    $region23: #{tpu_custom_call.1} parent=1 // pred_check_branch
      %55 = sbr.rel (0) target = $region25
    $region24: #{tpu_custom_call.1} parent=1 // pred_region
      %57 = dma.done [#allocation3], 128
    $region25: #{tpu_custom_call.1} parent=1 // pred_fallthru
      _
    // Predicated region
    $region26: #{tpu_custom_call.1} parent=1 // pred_check
      _
    $region27: #{tpu_custom_call.1} parent=1 // pred_check_branch
      %59 = sbr.rel (0) target = $region29
    $region28: #{tpu_custom_call.1} parent=1 // pred_region
      %61 = dma.done [#allocation6], 1024
    $region29: #{tpu_custom_call.1} parent=1 // pred_fallthru
      _
    // Predicated region
    $region30: #{tpu_custom_call.1} parent=1 // pred_check
      _
    $region31: #{tpu_custom_call.1} parent=1 // pred_check_branch
      %63 = sbr.rel (0) target = $region33
    $region32: #{tpu_custom_call.1} parent=1 // pred_region
      %65 = dma.done [#allocation6], 1024
    $region33: #{tpu_custom_call.1} parent=1 // pred_fallthru
      _
    %v66 = vld [vmem:[#allocation2] sm:$0xff]
    %v67 = vpack.c.bf16 %v66, %v66
    %v68 = vld [vmem:[#allocation5] sm:$0xf]
    %v69 = vld [vmem:[#allocation5 + $0x4] sm:$0xf]
    %v70 = vld [vmem:[#allocation5 + $0x8] sm:$0xf]
    %v71 = vld [vmem:[#allocation5 + $0xc] sm:$0xf]
    %v72 = vld [vmem:[#allocation5 + $0x10] sm:$0xf]
    %v73 = vld [vmem:[#allocation5 + $0x14] sm:$0xf]
    %v74 = vld [vmem:[#allocation5 + $0x18] sm:$0xf]
    %v75 = vld [vmem:[#allocation5 + $0x1c] sm:$0xf]
    %v76 = vld [vmem:[#allocation5 + $0x20] sm:$0xf]
    %v77 = vld [vmem:[#allocation5 + $0x24] sm:$0xf]
    %v78 = vld [vmem:[#allocation5 + $0x28] sm:$0xf]
    %v79 = vld [vmem:[#allocation5 + $0x2c] sm:$0xf]
    %v80 = vld [vmem:[#allocation5 + $0x30] sm:$0xf]
    %v81 = vld [vmem:[#allocation5 + $0x34] sm:$0xf]
    %v82 = vld [vmem:[#allocation5 + $0x38] sm:$0xf]
    %v83 = vld [vmem:[#allocation5 + $0x3c] sm:$0xf]
    %v84 = vld [vmem:[%s2] sm:$0x1]
    %v86 = vperm.slane %v84, 0
    %v104 = vunpack.c.l.b16 %v68
    %v105 = vunpack.c.l.b16 %v69
    %v106 = vunpack.c.l.b16 %v70
    %v107 = vunpack.c.l.b16 %v71
    %v108 = vunpack.c.l.b16 %v72
    %v109 = vunpack.c.l.b16 %v73
    %v110 = vunpack.c.l.b16 %v74
    %v111 = vunpack.c.l.b16 %v75
    %v112 = vunpack.c.l.b16 %v76
    %v113 = vunpack.c.l.b16 %v77
    %v114 = vunpack.c.l.b16 %v78
    %v115 = vunpack.c.l.b16 %v79
    %v116 = vunpack.c.l.b16 %v80
    %v117 = vunpack.c.l.b16 %v81
    %v118 = vunpack.c.l.b16 %v82
    %v119 = vunpack.c.l.b16 %v83
    %v120 = vpack.c.b16 %v105, %v104
    %v121 = vpack.c.b16 %v107, %v106
    %v122 = vpack.c.b16 %v109, %v108
    %v123 = vpack.c.b16 %v111, %v110
    %v124 = vpack.c.b16 %v113, %v112
    %v125 = vpack.c.b16 %v115, %v114
    %v126 = vpack.c.b16 %v117, %v116
    %v127 = vpack.c.b16 %v119, %v118
    %136 = vmatpush.bf16.msra.mxu0 %v127
    %137 = vmatpush.bf16.msra.mxu0 %v126
    %138 = vmatpush.bf16.msra.mxu0 %v125
    %139 = vmatpush.bf16.msra.mxu0 %v124
    %140 = vmatpush.bf16.msra.mxu0 %v123
    %141 = vmatpush.bf16.msra.mxu0 %v122
    %142 = vmatpush.bf16.msra.mxu0 %v121
    %143 = vmatpush.bf16.msra.mxu0 %v120
    %144 = vmatmul.bf16.gmra.mxu0 %v67
    %v145 = vpop.f32.mrf.mxu0
    %v146 = vadd.f32 %v86, %v145
    %v147 = vpop.f32.mrf.mxu0
    %148 = vdwg.mxu0
    %v149 = vmax.f32 %v146, 0.0
    %v150 = vpack.c.bf16 %v149, %v149
    %v151 = vld [vmem:[#allocation7] sm:$0xf]
    %v152 = vld [vmem:[#allocation7 + $0x4] sm:$0xf]
    %v153 = vld [vmem:[#allocation7 + $0x8] sm:$0xf]
    %v154 = vld [vmem:[#allocation7 + $0xc] sm:$0xf]
    %v155 = vld [vmem:[#allocation7 + $0x10] sm:$0xf]
    %v156 = vld [vmem:[#allocation7 + $0x14] sm:$0xf]
    %v157 = vld [vmem:[#allocation7 + $0x18] sm:$0xf]
    %v158 = vld [vmem:[#allocation7 + $0x1c] sm:$0xf]
    %v159 = vld [vmem:[#allocation7 + $0x20] sm:$0xf]
    %v160 = vld [vmem:[#allocation7 + $0x24] sm:$0xf]
    %v161 = vld [vmem:[#allocation7 + $0x28] sm:$0xf]
    %v162 = vld [vmem:[#allocation7 + $0x2c] sm:$0xf]
    %v163 = vld [vmem:[#allocation7 + $0x30] sm:$0xf]
    %v164 = vld [vmem:[#allocation7 + $0x34] sm:$0xf]
    %v165 = vld [vmem:[#allocation7 + $0x38] sm:$0xf]
    %v166 = vld [vmem:[#allocation7 + $0x3c] sm:$0xf]
    %v167 = vld [vmem:[%s4] sm:$0x1]
    %v169 = vperm.slane %v167, 0
    %v187 = vunpack.c.l.b16 %v151
    %v188 = vunpack.c.l.b16 %v152
    %v189 = vunpack.c.l.b16 %v153
    %v190 = vunpack.c.l.b16 %v154
    %v191 = vunpack.c.l.b16 %v155
    %v192 = vunpack.c.l.b16 %v156
    %v193 = vunpack.c.l.b16 %v157
    %v194 = vunpack.c.l.b16 %v158
    %v195 = vunpack.c.l.b16 %v159
    %v196 = vunpack.c.l.b16 %v160
    %v197 = vunpack.c.l.b16 %v161
    %v198 = vunpack.c.l.b16 %v162
    %v199 = vunpack.c.l.b16 %v163
    %v200 = vunpack.c.l.b16 %v164
    %v201 = vunpack.c.l.b16 %v165
    %v202 = vunpack.c.l.b16 %v166
    %v203 = vpack.c.b16 %v188, %v187
    %v204 = vpack.c.b16 %v190, %v189
    %v205 = vpack.c.b16 %v192, %v191
    %v206 = vpack.c.b16 %v194, %v193
    %v207 = vpack.c.b16 %v196, %v195
    %v208 = vpack.c.b16 %v198, %v197
    %v209 = vpack.c.b16 %v200, %v199
    %v210 = vpack.c.b16 %v202, %v201
    %219 = vmatpush.bf16.msra.mxu0 %v210
    %220 = vmatpush.bf16.msra.mxu0 %v209
    %221 = vmatpush.bf16.msra.mxu0 %v208
    %222 = vmatpush.bf16.msra.mxu0 %v207
    %223 = vmatpush.bf16.msra.mxu0 %v206
    %224 = vmatpush.bf16.msra.mxu0 %v205
    %225 = vmatpush.bf16.msra.mxu0 %v204
    %226 = vmatpush.bf16.msra.mxu0 %v203
    %227 = vmatmul.bf16.gmra.mxu0 %v150
    %v228 = vpop.f32.mrf.mxu0
    %v229 = vadd.f32 %v169, %v228
    %v230 = vpop.f32.mrf.mxu0
    %231 = vdwg.mxu0
    %v232 = vmax.f32 %v229, 0.0
    %v233 = vadd.f32 %v232, %v66
    %234 = vst [vmem:[#allocation8] sm:$0xff] %v233
    // Predicated region
    $region34: #{tpu_custom_call.1} parent=1 // pred_check
      _
    $region35: #{tpu_custom_call.1} parent=1 // pred_check_branch
      %236 = sbr.rel (0) target = $region37
    $region36: #{tpu_custom_call.1} parent=1 // pred_region
      %238 = vsyncadd [#allocation4], 0
      %s240 = sshll.u32 [#allocation8], 4
      %s241 = int_to_ptr.vmem [resolvable:$true] %s240
      %s242 = sshll.u32 %s5, 4
      %s243 = int_to_ptr.hbm [resolvable:$true] %s242
      %245 = dma.vmem_to_hbm [thread:$0]  %s241, 128, %s243, [#allocation4]
    $region37: #{tpu_custom_call.1} parent=1 // pred_fallthru
      _
    // Predicated region
    $region38: #{tpu_custom_call.1} parent=1 // pred_check
      _
    $region39: #{tpu_custom_call.1} parent=1 // pred_check_branch
      %247 = sbr.rel (0) target = $region41
    $region40: #{tpu_custom_call.1} parent=1 // pred_region
      %249 = dma.done [#allocation4], 128
    $region41: #{tpu_custom_call.1} parent=1 // pred_fallthru
      _
    %250 = vsyncpa [#allocation3], 1
    %251 = vsyncpa [#allocation6], 1
    %252 = vsyncpa [#allocation4], 1

</llo_original>
